<compile_context>
chip_gen: v7x
topology: tpu7x:2x2x1
jax: 0.10.0
libtpu: 0.0.40
codegen_flags: <defaults>
</compile_context>

<pallas_src>
import functools

import jax
import jax.numpy as jnp
from jax.experimental import pallas as pl
from jax.experimental.pallas import tpu as pltpu

_LANE = 128


def _round_up(n, m):
    return ((n + m - 1) // m) * m


def _clip_loss_kernel(x_ref, y_ref, temp_ref, *refs, write_logits):
    if write_logits:
        logits_ref, loss_ref, acc_ref, xx_ref, yy_ref = refs
    else:
        loss_ref, acc_ref, xx_ref, yy_ref = refs

    k = pl.program_id(0)

    @pl.when(k == 0)
    def _init():
        acc_ref[...] = jnp.zeros_like(acc_ref)
        xx_ref[...] = jnp.zeros_like(xx_ref)
        yy_ref[...] = jnp.zeros_like(yy_ref)

    x = x_ref[...]
    y = y_ref[...]
    xf = x.astype(jnp.float32)
    yf = y.astype(jnp.float32)

    # Row sums-of-squares.  xx stays a (B,1) column (natural lane reduction);
    # yy is accumulated directly in (1,B) row layout via a tiny MXU matvec so
    # the epilogue never needs an XLU transpose.
    xx_ref[...] += jnp.sum(xf * xf, axis=-1, keepdims=True)
    ones_row = jnp.ones((1, yf.shape[-1]), jnp.float32)
    yy_ref[...] += jax.lax.dot_general(
        ones_row, yf * yf,
        dimension_numbers=(((1,), (1,)), ((), ())),
        preferred_element_type=jnp.float32)

    # Un-normalized x @ y.T for this K tile (contract last dims; no transpose).
    acc_ref[...] += jax.lax.dot_general(
        x, y,
        dimension_numbers=(((1,), (1,)), ((), ())),
        preferred_element_type=jnp.float32)

    @pl.when(k == pl.num_programs(0) - 1)
    def _finalize():
        b = acc_ref.shape[0]
        scale = jnp.exp(temp_ref[...])               # (1, 1)
        sx = jax.lax.rsqrt(xx_ref[...]) * scale      # (B, 1): exp(temp) folded here
        sy = jax.lax.rsqrt(yy_ref[...])              # (1, B)
        logits = acc_ref[...] * sx * sy              # (B, B)
        if write_logits:
            logits_ref[...] = logits

        # Symmetric cross-entropy with targets = arange(B), reduction='mean'.
        # diag(logits) == diag(logits.T) -> compute it once; column-direction
        # CE uses axis=0 reductions on the SAME logits (no logits.T).
        rows = jax.lax.broadcasted_iota(jnp.int32, (b, b), 0)
        cols = jax.lax.broadcasted_iota(jnp.int32, (b, b), 1)
        diag_sum = jnp.sum(jnp.where(rows == cols, logits, 0.0))

        m_r = jnp.max(logits, axis=1, keepdims=True)
        lse_r = jnp.log(jnp.sum(jnp.exp(logits - m_r), axis=1, keepdims=True)) + m_r
        m_c = jnp.max(logits, axis=0, keepdims=True)
        lse_c = jnp.log(jnp.sum(jnp.exp(logits - m_c), axis=0, keepdims=True)) + m_c

        loss = 0.5 * (jnp.sum(lse_r) + jnp.sum(lse_c) - 2.0 * diag_sum) / b
        loss_ref[...] = jnp.reshape(loss, (1, 1))


def clip_loss(x, y, temp, return_logits=False, block_k=2048):
    """x, y: (B, F, T); temp: scalar parameter (self.temp). fast=True path."""
    b = x.shape[0]
    assert b > 1, "Batch size must be greater than 1."

    xf = x.reshape(b, -1)
    yf = y.reshape(b, -1)
    if xf.dtype not in (jnp.float32, jnp.bfloat16):
        xf = xf.astype(jnp.float32)
        yf = yf.astype(jnp.float32)
    d = xf.shape[1]

    # Pad the feature dim to be lane-dense (multiple of 128) and divisible by
    # the K tile.  Zero padding changes neither the norms nor the dots.
    dp = _round_up(d, _LANE)
    tk = min(dp, block_k)
    dp = _round_up(d, tk)
    if dp != d:
        pad = ((0, 0), (0, dp - d))
        xf = jnp.pad(xf, pad)
        yf = jnp.pad(yf, pad)
    nk = dp // tk

    temp2 = jnp.asarray(temp, jnp.float32).reshape(1, 1)

    kernel = functools.partial(_clip_loss_kernel, write_logits=return_logits)

    out_shape = [jax.ShapeDtypeStruct((1, 1), jnp.float32)]
    out_specs = [pl.BlockSpec((1, 1), lambda k: (0, 0))]
    if return_logits:
        out_shape = [jax.ShapeDtypeStruct((b, b), jnp.float32)] + out_shape
        out_specs = [pl.BlockSpec((b, b), lambda k: (0, 0))] + out_specs

    in_itemsize = xf.dtype.itemsize
    vmem_est = (
        2 * 2 * b * tk * in_itemsize                  # double-buffered x / y tiles
        + (7 if return_logits else 6) * b * b * 4     # acc + logits + epilogue temps
        + 4 * b * _LANE * 4                           # xx / yy scratch (padded) + headroom
        + (2 << 20))
    vmem_limit = int(min(64 << 20, max(vmem_est, 32 << 20)))

    outs = pl.pallas_call(
        kernel,
        out_shape=tuple(out_shape),
        grid=(nk,),
        in_specs=[
            pl.BlockSpec((b, tk), lambda k: (0, k)),
            pl.BlockSpec((b, tk), lambda k: (0, k)),
            pl.BlockSpec((1, 1), lambda k: (0, 0)),
        ],
        out_specs=tuple(out_specs),
        scratch_shapes=[
            pltpu.VMEM((b, b), jnp.float32),   # un-normalized x @ y.T accumulator
            pltpu.VMEM((b, 1), jnp.float32),   # sum(x^2) per row
            pltpu.VMEM((1, b), jnp.float32),   # sum(y^2) per row, stored as a row
        ],
        compiler_params=pltpu.CompilerParams(
            dimension_semantics=("arbitrary",),
            vmem_limit_bytes=vmem_limit,
        ),
    )(xf, yf, temp2)

    if return_logits:
        logits, loss = outs
        return logits, loss[0, 0]
    (loss,) = outs
    return loss[0, 0]


def _reference(x, y, temp):
    # Pure-JAX reference mirroring the PyTorch fast path.
    b = x.shape[0]
    xf = x.reshape(b, -1).astype(jnp.float32)
    yf = y.reshape(b, -1).astype(jnp.float32)
    xf = xf / jnp.linalg.norm(xf, axis=-1, keepdims=True)
    yf = yf / jnp.linalg.norm(yf, axis=-1, keepdims=True)
    logits = (xf @ yf.T) * jnp.exp(jnp.asarray(temp, jnp.float32))
    t = jnp.arange(b)
    lp1 = jax.nn.log_softmax(logits, axis=-1)
    lp2 = jax.nn.log_softmax(logits.T, axis=-1)
    ce1 = -jnp.mean(lp1[t, t])
    ce2 = -jnp.mean(lp2[t, t])
    return logits, 0.5 * (ce1 + ce2)


if __name__ == "__main__":
    key = jax.random.PRNGKey(0)
    kx, ky = jax.random.split(key)
    B, F, T = 8, 4, 8               # small (b, f, t) shapes implied by forward()
    init_temperature = 0.1          # deterministic init for the self.temp parameter

    x = jax.random.normal(kx, (B, F, T), dtype=jnp.float32)
    y = jax.random.normal(ky, (B, F, T), dtype=jnp.float32)

    logits, loss = clip_loss(x, y, init_temperature, return_logits=True)
    loss_only = clip_loss(x, y, init_temperature, return_logits=False)
    jax.block_until_ready((logits, loss, loss_only))

    ref_logits, ref_loss = _reference(x, y, init_temperature)
    assert jnp.allclose(logits, ref_logits, atol=1e-4, rtol=1e-4)
    assert jnp.allclose(loss, ref_loss, atol=1e-4, rtol=1e-4), (float(loss), float(ref_loss))
    assert jnp.allclose(loss_only, ref_loss, atol=1e-4, rtol=1e-4)

    print("KERNEL_OK")
</pallas_src>

<mosaic_0001>
module attributes {stable_mosaic.version = 11 : i64} {
  func.func @_clip_loss_kernel(%arg0: i32, %arg1: memref<8x128xf32, #tpu.memory_space<vmem>>, %arg2: memref<8x128xf32, #tpu.memory_space<vmem>>, %arg3: memref<1x1xf32, #tpu.memory_space<vmem>>, %arg4: memref<8x8xf32, #tpu.memory_space<vmem>>, %arg5: memref<1x1xf32, #tpu.memory_space<vmem>>, %arg6: memref<8x8xf32, #tpu.memory_space<vmem>>, %arg7: memref<8x1xf32, #tpu.memory_space<vmem>>, %arg8: memref<1x8xf32, #tpu.memory_space<vmem>>) attributes {dimension_semantics = [#tpu.dimension_semantics<arbitrary>], iteration_bounds = array<i64: 1>, scalar_prefetch = 0 : i64, scratch_operands = 3 : i64, tpu.core_type = #tpu.core_type<tc>, window_params = [{transform_indices = @transform_0, window_bounds = array<i64: 8, 128>}, {transform_indices = @transform_1, window_bounds = array<i64: 8, 128>}, {pipeline_mode = #tpu.pipeline_mode<synchronous>, transform_indices = @transform_2, window_bounds = array<i64: 1, 1>}, {pipeline_mode = #tpu.pipeline_mode<synchronous>, transform_indices = @transform_3, window_bounds = array<i64: 8, 8>}, {pipeline_mode = #tpu.pipeline_mode<synchronous>, transform_indices = @transform_4, window_bounds = array<i64: 1, 1>}]} {
    %c0_i32 = arith.constant 0 : i32
    %0 = arith.cmpi eq, %arg0, %c0_i32 : i32
    %1 = arith.extui %0 : i1 to i32
    %c0_i32_0 = arith.constant 0 : i32
    %2 = arith.cmpi ne, %1, %c0_i32_0 : i32
    scf.if %2 {
      %cst_21 = arith.constant 0.000000e+00 : f32
      %24 = vector.broadcast %cst_21 : f32 to vector<8x8xf32>
      %c0_22 = arith.constant 0 : index
      %c0_23 = arith.constant 0 : index
      %25 = vector.load %arg6[%c0_22, %c0_23] : memref<8x8xf32, #tpu.memory_space<vmem>>, vector<8x8xf32>
      tpu.vector_store %arg6[%c0_22, %c0_23], %24 {strides = array<i32>} : memref<8x8xf32, #tpu.memory_space<vmem>>, vector<8x8xf32>,
      %cst_24 = arith.constant 0.000000e+00 : f32
      %26 = vector.broadcast %cst_24 : f32 to vector<8x1xf32>
      %c0_25 = arith.constant 0 : index
      %c0_26 = arith.constant 0 : index
      %27 = vector.load %arg7[%c0_25, %c0_26] : memref<8x1xf32, #tpu.memory_space<vmem>>, vector<8x1xf32>
      tpu.vector_store %arg7[%c0_25, %c0_26], %26 {strides = array<i32>} : memref<8x1xf32, #tpu.memory_space<vmem>>, vector<8x1xf32>,
      %cst_27 = arith.constant 0.000000e+00 : f32
      %28 = vector.broadcast %cst_27 : f32 to vector<1x8xf32>
      %c0_28 = arith.constant 0 : index
      %c0_29 = arith.constant 0 : index
      %29 = vector.load %arg8[%c0_28, %c0_29] : memref<1x8xf32, #tpu.memory_space<vmem>>, vector<1x8xf32>
      tpu.vector_store %arg8[%c0_28, %c0_29], %28 {strides = array<i32>} : memref<1x8xf32, #tpu.memory_space<vmem>>, vector<1x8xf32>,
    } else {
    }
    %c0 = arith.constant 0 : index
    %c0_1 = arith.constant 0 : index
    %3 = vector.load %arg1[%c0, %c0_1] : memref<8x128xf32, #tpu.memory_space<vmem>>, vector<8x128xf32>
    %c0_2 = arith.constant 0 : index
    %c0_3 = arith.constant 0 : index
    %4 = vector.load %arg2[%c0_2, %c0_3] : memref<8x128xf32, #tpu.memory_space<vmem>>, vector<8x128xf32>
    %c0_4 = arith.constant 0 : index
    %c0_5 = arith.constant 0 : index
    %5 = vector.load %arg7[%c0_4, %c0_5] : memref<8x1xf32, #tpu.memory_space<vmem>>, vector<8x1xf32>
    %6 = arith.mulf %3, %3 : vector<8x128xf32>
    %cst = arith.constant dense<0.000000e+00> : vector<8xf32>
    %7 = vector.multi_reduction <add>, %6, %cst [1] : vector<8x128xf32> to vector<8xf32>
    %8 = vector.shape_cast %7 : vector<8xf32> to vector<8x1xf32>
    %9 = arith.addf %5, %8 : vector<8x1xf32>
    %c0_6 = arith.constant 0 : index
    %c0_7 = arith.constant 0 : index
    %10 = vector.load %arg7[%c0_6, %c0_7] : memref<8x1xf32, #tpu.memory_space<vmem>>, vector<8x1xf32>
    tpu.vector_store %arg7[%c0_6, %c0_7], %9 {strides = array<i32>} : memref<8x1xf32, #tpu.memory_space<vmem>>, vector<8x1xf32>,
    %cst_8 = arith.constant 1.000000e+00 : f32
    %11 = vector.broadcast %cst_8 : f32 to vector<1x128xf32>
    %c0_9 = arith.constant 0 : index
    %c0_10 = arith.constant 0 : index
    %12 = vector.load %arg8[%c0_9, %c0_10] : memref<1x8xf32, #tpu.memory_space<vmem>>, vector<1x8xf32>
    %13 = arith.mulf %4, %4 : vector<8x128xf32>
    %cst_11 = arith.constant dense<0.000000e+00> : vector<1x8xf32>
    %14 = tpu.matmul %11, %13, %cst_11 {dimension_numbers = #tpu.dot_dimension_numbers<[1], [1], [0], [0], [0, 0, 1, 0], [], []>} : vector<1x128xf32>, vector<8x128xf32>, vector<1x8xf32> -> vector<1x8xf32>
    %15 = arith.addf %12, %14 : vector<1x8xf32>
    %c0_12 = arith.constant 0 : index
    %c0_13 = arith.constant 0 : index
    %16 = vector.load %arg8[%c0_12, %c0_13] : memref<1x8xf32, #tpu.memory_space<vmem>>, vector<1x8xf32>
    tpu.vector_store %arg8[%c0_12, %c0_13], %15 {strides = array<i32>} : memref<1x8xf32, #tpu.memory_space<vmem>>, vector<1x8xf32>,
    %c0_14 = arith.constant 0 : index
    %c0_15 = arith.constant 0 : index
    %17 = vector.load %arg6[%c0_14, %c0_15] : memref<8x8xf32, #tpu.memory_space<vmem>>, vector<8x8xf32>
    %cst_16 = arith.constant dense<0.000000e+00> : vector<8x8xf32>
    %18 = tpu.matmul %3, %4, %cst_16 {dimension_numbers = #tpu.dot_dimension_numbers<[1], [1], [0], [0], [0, 0, 1, 0], [], []>} : vector<8x128xf32>, vector<8x128xf32>, vector<8x8xf32> -> vector<8x8xf32>
    %19 = arith.addf %17, %18 : vector<8x8xf32>
    %c0_17 = arith.constant 0 : index
    %c0_18 = arith.constant 0 : index
    %20 = vector.load %arg6[%c0_17, %c0_18] : memref<8x8xf32, #tpu.memory_space<vmem>>, vector<8x8xf32>
    tpu.vector_store %arg6[%c0_17, %c0_18], %19 {strides = array<i32>} : memref<8x8xf32, #tpu.memory_space<vmem>>, vector<8x8xf32>,
    %c0_i32_19 = arith.constant 0 : i32
    %21 = arith.cmpi eq, %arg0, %c0_i32_19 : i32
    %22 = arith.extui %21 : i1 to i32
    %c0_i32_20 = arith.constant 0 : i32
    %23 = arith.cmpi ne, %22, %c0_i32_20 : i32
    scf.if %23 {
      %c0_21 = arith.constant 0 : index
      %c0_22 = arith.constant 0 : index
      %24 = vector.load %arg3[%c0_21, %c0_22] : memref<1x1xf32, #tpu.memory_space<vmem>>, vector<1x1xf32>
      %25 = math.exp %24 : vector<1x1xf32>
      %c0_23 = arith.constant 0 : index
      %c0_24 = arith.constant 0 : index
      %26 = vector.load %arg7[%c0_23, %c0_24] : memref<8x1xf32, #tpu.memory_space<vmem>>, vector<8x1xf32>
      %27 = math.rsqrt %26 : vector<8x1xf32>
      %28 = vector.broadcast %25 : vector<1x1xf32> to vector<8x1xf32>
      %29 = arith.mulf %27, %28 : vector<8x1xf32>
      %c0_25 = arith.constant 0 : index
      %c0_26 = arith.constant 0 : index
      %30 = vector.load %arg8[%c0_25, %c0_26] : memref<1x8xf32, #tpu.memory_space<vmem>>, vector<1x8xf32>
      %31 = math.rsqrt %30 : vector<1x8xf32>
      %c0_27 = arith.constant 0 : index
      %c0_28 = arith.constant 0 : index
      %32 = vector.load %arg6[%c0_27, %c0_28] : memref<8x8xf32, #tpu.memory_space<vmem>>, vector<8x8xf32>
      %33 = vector.broadcast %29 : vector<8x1xf32> to vector<8x8xf32>
      %34 = arith.mulf %32, %33 : vector<8x8xf32>
      %35 = vector.broadcast %31 : vector<1x8xf32> to vector<8x8xf32>
      %36 = arith.mulf %34, %35 : vector<8x8xf32>
      %c0_29 = arith.constant 0 : index
      %c0_30 = arith.constant 0 : index
      %37 = vector.load %arg4[%c0_29, %c0_30] : memref<8x8xf32, #tpu.memory_space<vmem>>, vector<8x8xf32>
      tpu.vector_store %arg4[%c0_29, %c0_30], %36 {strides = array<i32>} : memref<8x8xf32, #tpu.memory_space<vmem>>, vector<8x8xf32>,
      %38 = tpu.iota {dimensions = array<i32: 0>} : vector<8x8xi32>
      %39 = tpu.iota {dimensions = array<i32: 1>} : vector<8x8xi32>
      %40 = arith.cmpi eq, %38, %39 : vector<8x8xi32>
      %cst_31 = arith.constant 0.000000e+00 : f32
      %41 = vector.broadcast %cst_31 : f32 to vector<8x8xf32>
      %42 = arith.select %40, %36, %41 : vector<8x8xi1>, vector<8x8xf32>
      %43 = vector.shape_cast %42 : vector<8x8xf32> to vector<1x8x8xf32>
      %cst_32 = arith.constant dense<0.000000e+00> : vector<1xf32>
      %44 = vector.multi_reduction <add>, %43, %cst_32 [1, 2] : vector<1x8x8xf32> to vector<1xf32>
      %45 = vector.shape_cast %44 : vector<1xf32> to vector<1x1x1xf32>
      %46 = vector.extract %45[0, 0, 0] : f32 from vector<1x1x1xf32>
      %cst_33 = arith.constant dense<0xFF800000> : vector<8xf32>
      %47 = vector.multi_reduction <maximumf>, %36, %cst_33 [1] : vector<8x8xf32> to vector<8xf32>
      %48 = vector.shape_cast %47 : vector<8xf32> to vector<8x1xf32>
      %49 = vector.broadcast %48 : vector<8x1xf32> to vector<8x8xf32>
      %50 = arith.subf %36, %49 : vector<8x8xf32>
      %51 = math.exp %50 : vector<8x8xf32>
      %cst_34 = arith.constant dense<0.000000e+00> : vector<8xf32>
      %52 = vector.multi_reduction <add>, %51, %cst_34 [1] : vector<8x8xf32> to vector<8xf32>
      %53 = vector.shape_cast %52 : vector<8xf32> to vector<8x1xf32>
      %54 = math.log %53 : vector<8x1xf32>
      %55 = arith.addf %54, %48 : vector<8x1xf32>
      %cst_35 = arith.constant dense<0xFF800000> : vector<8xf32>
      %56 = vector.multi_reduction <maximumf>, %36, %cst_35 [0] : vector<8x8xf32> to vector<8xf32>
      %57 = vector.shape_cast %56 : vector<8xf32> to vector<1x8xf32>
      %58 = vector.broadcast %57 : vector<1x8xf32> to vector<8x8xf32>
      %59 = arith.subf %36, %58 : vector<8x8xf32>
      %60 = math.exp %59 : vector<8x8xf32>
      %cst_36 = arith.constant dense<0.000000e+00> : vector<8xf32>
      %61 = vector.multi_reduction <add>, %60, %cst_36 [0] : vector<8x8xf32> to vector<8xf32>
      %62 = vector.shape_cast %61 : vector<8xf32> to vector<1x8xf32>
      %63 = math.log %62 : vector<1x8xf32>
      %64 = arith.addf %63, %57 : vector<1x8xf32>
      %65 = vector.shape_cast %55 : vector<8x1xf32> to vector<1x8x1xf32>
      %cst_37 = arith.constant dense<0.000000e+00> : vector<1xf32>
      %66 = vector.multi_reduction <add>, %65, %cst_37 [1, 2] : vector<1x8x1xf32> to vector<1xf32>
      %67 = vector.shape_cast %66 : vector<1xf32> to vector<1x1x1xf32>
      %68 = vector.extract %67[0, 0, 0] : f32 from vector<1x1x1xf32>
      %69 = vector.shape_cast %64 : vector<1x8xf32> to vector<1x1x8xf32>
      %cst_38 = arith.constant dense<0.000000e+00> : vector<1xf32>
      %70 = vector.multi_reduction <add>, %69, %cst_38 [1, 2] : vector<1x1x8xf32> to vector<1xf32>
      %71 = vector.shape_cast %70 : vector<1xf32> to vector<1x1x1xf32>
      %72 = vector.extract %71[0, 0, 0] : f32 from vector<1x1x1xf32>
      %73 = arith.addf %68, %72 : f32
      %cst_39 = arith.constant 2.000000e+00 : f32
      %74 = arith.mulf %cst_39, %46 : f32
      %75 = arith.subf %73, %74 : f32
      %cst_40 = arith.constant 5.000000e-01 : f32
      %76 = arith.mulf %cst_40, %75 : f32
      %cst_41 = arith.constant 8.000000e+00 : f32
      %77 = arith.divf %76, %cst_41 : f32
      %78 = vector.broadcast %77 : f32 to vector<1x1xf32>
      %c0_42 = arith.constant 0 : index
      %c0_43 = arith.constant 0 : index
      %79 = vector.load %arg5[%c0_42, %c0_43] : memref<1x1xf32, #tpu.memory_space<vmem>>, vector<1x1xf32>
      tpu.vector_store %arg5[%c0_42, %c0_43], %78 {strides = array<i32>} : memref<1x1xf32, #tpu.memory_space<vmem>>, vector<1x1xf32>,
    } else {
    }
    return
  }
  func.func @transform_0(%arg0: i32) -> (i32, i32) {
    %c0_i32 = arith.constant 0 : i32
    %c0_i32_0 = arith.constant 0 : i32
    return %c0_i32, %arg0 : i32, i32
  }
  func.func @transform_1(%arg0: i32) -> (i32, i32) {
    %c0_i32 = arith.constant 0 : i32
    %c0_i32_0 = arith.constant 0 : i32
    return %c0_i32, %arg0 : i32, i32
  }
  func.func @transform_2(%arg0: i32) -> (i32, i32) {
    %c0_i32 = arith.constant 0 : i32
    %c0_i32_0 = arith.constant 0 : i32
    %c0_i32_1 = arith.constant 0 : i32
    return %c0_i32, %c0_i32_0 : i32, i32
  }
  func.func @transform_3(%arg0: i32) -> (i32, i32) {
    %c0_i32 = arith.constant 0 : i32
    %c0_i32_0 = arith.constant 0 : i32
    %c0_i32_1 = arith.constant 0 : i32
    return %c0_i32, %c0_i32_0 : i32, i32
  }
  func.func @transform_4(%arg0: i32) -> (i32, i32) {
    %c0_i32 = arith.constant 0 : i32
    %c0_i32_0 = arith.constant 0 : i32
    %c0_i32_1 = arith.constant 0 : i32
    return %c0_i32, %c0_i32_0 : i32, i32
  }
}

</mosaic_0001>

<llo_original>
// kernel: tpu_custom_call.1
$region0: #{tpu_custom_call.1}
  #allocation0 [shape = 'u32[]', space=smem, size = 0x4, offset = 0x4, fixed_abs, tag = 'smem constant byte address 0x4 - core index']
  #allocation1 [shape = 'u32[144,128]{1,0:T(1,128)}', space=vmem, size = 0x12000, scoped, tag = 'internal scratch']
  #allocation2 [shape = 'f32[8,8]{1,0:T(8,128)}', space=vmem, size = 0x1000, scoped, tag = 'scratch operand']
  #allocation3 [shape = 'f32[8,1]{1,0:T(8,128)}', space=vmem, size = 0x1000, scoped, tag = 'scratch operand']
  #allocation4 [shape = 'f32[1,8]{1,0:T(1,128)}', space=vmem, size = 0x200, scoped, tag = 'scratch operand']
  #allocation5 [shape = 'f32[1,1]{1,0:T(1,128)S(1)}', space=vmem, size = 0x200, scoped, tag = 'scoped memory for tpu_custom_call.1']
  %s0 = inlined_call_operand.hbm [shape: f32[8,128], index: 0, kind: input, shape index: {}]
  %s1 = inlined_call_operand.hbm [shape: f32[8,128], index: 1, kind: input, shape index: {}]
  %s2 = inlined_call_operand.<no memory space> [shape: f32[1,1], index: 2, kind: input, shape index: {}]
  %s3 = inlined_call_operand.hbm [shape: f32[8,8], index: 3, kind: output, shape index: {0}]
  %s4 = inlined_call_operand.hbm [shape: f32[1,1], index: 4, kind: output, shape index: {1}]
  %5 = xla_tuple %s3, %s4
  %s6 = sld [smem:[#allocation0]]
  $region46: #{tpu_custom_call.1} parent=0
    _
  %s8 = ssub.s32 1, %s6
  %s9 = scalar_select 0, %s8, %s6
  %v10 = vstv %s2
  %11 = vst [vmem:[#allocation5] sm:$0x1] %v10
  $region1: #{tpu_custom_call.1} parent=0
    #allocation6 [shape = 'u8[4096]{0}', space=vmem, size = 0x1000, scoped, tag = 'input window, operand 0, single buffered']
    #allocation7 [shape = 's32[1]{0}', space=sflag, size = 0x4, scoped, tag = 'scoped memory for tpu_custom_call.1']
    #allocation8 [shape = 's32[1]{0}', space=sflag, size = 0x4, scoped, tag = 'scoped memory for tpu_custom_call.1']
    #allocation9 [shape = 'u8[4096]{0}', space=vmem, size = 0x1000, scoped, tag = 'input window, operand 1, single buffered']
    #allocation10 [shape = 's32[1]{0}', space=sflag, size = 0x4, scoped, tag = 'scoped memory for tpu_custom_call.1']
    #allocation11 [shape = 'u8[4096]{0}', space=vmem, size = 0x1000, scoped, tag = 'output window, operand 0, single buffered']
    #allocation12 [shape = 'u8[512]{0}', space=vmem, size = 0x400, scoped, tag = 'output window, operand 1, single buffered']
    #allocation13 [shape = 's32[1]{0}', space=sflag, size = 0x4, scoped, tag = 'scoped memory for tpu_custom_call.1']
    %12 = vsyncpa [#allocation7], 0
    %13 = vsyncpa [#allocation10], 0
    %14 = vsyncpa [#allocation8], 0
    %15 = vsyncpa [#allocation13], 0
    // Predicated region
    $region2: #{tpu_custom_call.1} parent=1 // pred_check
      _
    $region3: #{tpu_custom_call.1} parent=1 // pred_check_branch
      %17 = sbr.rel (0) target = $region5
    $region4: #{tpu_custom_call.1} parent=1 // pred_region
      %s19 = ssub.s32 128, 128
      %20 = vsyncadd [#allocation7], %s19
      %s22 = sshll.u32 [#allocation6], 4
      %s23 = int_to_ptr.vmem [resolvable:$true] %s22
      %25 = dma.hbm_to_vmem [thread:$0]  %s0, 128, %s23, [#allocation7]
    $region5: #{tpu_custom_call.1} parent=1 // pred_fallthru
      _
    // Predicated region
    $region6: #{tpu_custom_call.1} parent=1 // pred_check
      _
    $region7: #{tpu_custom_call.1} parent=1 // pred_check_branch
      %27 = sbr.rel (0) target = $region9
    $region8: #{tpu_custom_call.1} parent=1 // pred_region
      %s29 = ssub.s32 128, 128
      %30 = vsyncadd [#allocation10], %s29
      %s32 = sshll.u32 [#allocation9], 4
      %s33 = int_to_ptr.vmem [resolvable:$true] %s32
      %35 = dma.hbm_to_vmem [thread:$0]  %s1, 128, %s33, [#allocation10]
    $region9: #{tpu_custom_call.1} parent=1 // pred_fallthru
      _
    // Predicated region
    $region10: #{tpu_custom_call.1} parent=1 // pred_check
      _
    $region11: #{tpu_custom_call.1} parent=1 // pred_check_branch
      %37 = sbr.rel (0) target = $region13
    $region12: #{tpu_custom_call.1} parent=1 // pred_region
      _
    $region13: #{tpu_custom_call.1} parent=1 // pred_fallthru
      _
    // Predicated region
    $region14: #{tpu_custom_call.1} parent=1 // pred_check
      _
    $region15: #{tpu_custom_call.1} parent=1 // pred_check_branch
      %39 = sbr.rel (0) target = $region17
    $region16: #{tpu_custom_call.1} parent=1 // pred_region
      %40 = dma.done [#allocation7], 128
    $region17: #{tpu_custom_call.1} parent=1 // pred_fallthru
      _
    // Predicated region
    $region18: #{tpu_custom_call.1} parent=1 // pred_check
      _
    $region19: #{tpu_custom_call.1} parent=1 // pred_check_branch
      %42 = sbr.rel (0) target = $region21
    $region20: #{tpu_custom_call.1} parent=1 // pred_region
      %43 = dma.done [#allocation10], 128
    $region21: #{tpu_custom_call.1} parent=1 // pred_fallthru
      _
    %p44 = scmp.eq.s32.totalorder 0, 0
    // Predicated region
    $region22: #{tpu_custom_call.1} parent=1 // pred_check
      %p45 = pneg %p44
    $region23: #{tpu_custom_call.1} parent=1 // pred_check_branch
      %47 = sbr.rel (%p45) target = $region25
    $region24: #{tpu_custom_call.1} parent=1 // pred_region
      %vm48 = vcmask 64512
      %49 = vst.msk [vmem:[#allocation2] sm:$0xff] %vm48, 0.0
      %vm50 = vcmask 7168
      %51 = vst.msk [vmem:[#allocation3] sm:$0xff] %vm50, 0.0
      %vm52 = vcmask 57344
      %53 = vst.msk [vmem:[#allocation4] sm:$0x1] %vm52, 0.0
    $region25: #{tpu_custom_call.1} parent=1 // pred_fallthru
      _
    %v54 = vld [vmem:[#allocation6] sm:$0xff]
    %v55 = vld [vmem:[#allocation9] sm:$0xff]
    %v56 = vld [vmem:[#allocation3] sm:$0xff]
    %v57 = vmul.f32 %v54, %v54
    %58 = vadd.xlane.f32.xlu0 %v57
    %v59 = vpop.xlane.xlu0 %58
    %v60 = vadd.f32 %v56, %v59
    %vm61 = vcmask 7168
    %62 = vst.msk [vmem:[#allocation3] sm:$0xff] %vm61, %v60
    %v63 = vld [vmem:[#allocation4] sm:$0x1]
    %v64 = vmul.f32 %v55, %v55
    %65 = vmatprep.subr.mxu0 0.0
    %66 = vmatpush1.xpose.msra.mxu0 %v64
    %67 = vmatprep.subr.mxu0 0.0
    %68 = vmatpush1.xpose.msra.mxu0 0.0
    %69 = vmatprep.subr.mxu0 0.0
    %70 = vmatpush1.xpose.msra.mxu0 0.0
    %71 = vmatprep.subr.mxu0 0.0
    %72 = vmatpush1.xpose.msra.mxu0 0.0
    %73 = vmatprep.subr.mxu0 0.0
    %74 = vmatpush1.xpose.msra.mxu0 0.0
    %75 = vmatprep.subr.mxu0 0.0
    %76 = vmatpush1.xpose.msra.mxu0 0.0
    %77 = vmatprep.subr.mxu0 0.0
    %78 = vmatpush1.xpose.msra.mxu0 0.0
    %79 = vmatprep.subr.mxu0 0.0
    %80 = vmatpush1.xpose.msra.mxu0 0.0
    %81 = vmatprep.subr.mxu0 0.0
    %82 = vmatpush1.xpose.msra.mxu0 0.0
    %83 = vmatprep.subr.mxu0 0.0
    %84 = vmatpush1.xpose.msra.mxu0 0.0
    %85 = vmatprep.subr.mxu0 0.0
    %86 = vmatpush1.xpose.msra.mxu0 0.0
    %87 = vmatprep.subr.mxu0 0.0
    %88 = vmatpush1.xpose.msra.mxu0 0.0
    %89 = vmatprep.subr.mxu0 0.0
    %90 = vmatpush1.xpose.msra.mxu0 0.0
    %91 = vmatprep.subr.mxu0 0.0
    %92 = vmatpush1.xpose.msra.mxu0 0.0
    %93 = vmatprep.subr.mxu0 0.0
    %94 = vmatpush1.xpose.msra.mxu0 0.0
    %95 = vmatprep.subr.mxu0 0.0
    %96 = vmatpush1.xpose.msra.mxu0 0.0
    %97 = vmatprep.subr.mxu0 0.0
    %98 = vmatpush1.xpose.msra.mxu0 0.0
    %99 = vmatprep.subr.mxu0 0.0
    %100 = vmatpush1.xpose.msra.mxu0 0.0
    %101 = vmatprep.subr.mxu0 0.0
    %102 = vmatpush1.xpose.msra.mxu0 0.0
    %103 = vmatprep.subr.mxu0 0.0
    %104 = vmatpush1.xpose.msra.mxu0 0.0
    %105 = vmatprep.subr.mxu0 0.0
    %106 = vmatpush1.xpose.msra.mxu0 0.0
    %107 = vmatprep.subr.mxu0 0.0
    %108 = vmatpush1.xpose.msra.mxu0 0.0
    %109 = vmatprep.subr.mxu0 0.0
    %110 = vmatpush1.xpose.msra.mxu0 0.0
    %111 = vmatprep.subr.mxu0 0.0
    %112 = vmatpush1.xpose.msra.mxu0 0.0
    %113 = vmatprep.subr.mxu0 0.0
    %114 = vmatpush1.xpose.msra.mxu0 0.0
    %115 = vmatprep.subr.mxu0 0.0
    %116 = vmatpush1.xpose.msra.mxu0 0.0
    %117 = vmatprep.subr.mxu0 0.0
    %118 = vmatpush1.xpose.msra.mxu0 0.0
    %119 = vmatprep.subr.mxu0 0.0
    %120 = vmatpush1.xpose.msra.mxu0 0.0
    %121 = vmatprep.subr.mxu0 0.0
    %122 = vmatpush1.xpose.msra.mxu0 0.0
    %123 = vmatprep.subr.mxu0 0.0
    %124 = vmatpush1.xpose.msra.mxu0 0.0
    %125 = vmatprep.subr.mxu0 0.0
    %126 = vmatpush1.xpose.msra.mxu0 0.0
    %127 = vmatprep.subr.mxu0 0.0
    %128 = vmatpush1.xpose.msra.mxu0 0.0
    %129 = vmatprep.mubr.f32.mxu0 0.0
    %130 = vmatmul.mubr.f32.gmra.mrb[0].mxu0 1.0
    %v131 = vpop.f32.mrb[0].mxu0
    %v132 = vadd.f32 0.0, %v131
    %v133 = vpop.f32.mrb[0].mxu0
    %134 = vdwg.mxu0
    %v135 = vadd.f32 %v63, %v132
    %vm136 = vcmask 57344
    %137 = vst.msk [vmem:[#allocation4] sm:$0x1] %vm136, %v135
    %v138 = vld [vmem:[#allocation2] sm:$0xff]
    %139 = vmatprep.subr.mxu0 0.0
    %140 = vmatpush1.xpose.msra.mxu0 %v55
    %141 = vmatprep.subr.mxu0 0.0
    %142 = vmatpush1.xpose.msra.mxu0 0.0
    %143 = vmatprep.subr.mxu0 0.0
    %144 = vmatpush1.xpose.msra.mxu0 0.0
    %145 = vmatprep.subr.mxu0 0.0
    %146 = vmatpush1.xpose.msra.mxu0 0.0
    %147 = vmatprep.subr.mxu0 0.0
    %148 = vmatpush1.xpose.msra.mxu0 0.0
    %149 = vmatprep.subr.mxu0 0.0
    %150 = vmatpush1.xpose.msra.mxu0 0.0
    %151 = vmatprep.subr.mxu0 0.0
    %152 = vmatpush1.xpose.msra.mxu0 0.0
    %153 = vmatprep.subr.mxu0 0.0
    %154 = vmatpush1.xpose.msra.mxu0 0.0
    %155 = vmatprep.subr.mxu0 0.0
    %156 = vmatpush1.xpose.msra.mxu0 0.0
    %157 = vmatprep.subr.mxu0 0.0
    %158 = vmatpush1.xpose.msra.mxu0 0.0
    %159 = vmatprep.subr.mxu0 0.0
    %160 = vmatpush1.xpose.msra.mxu0 0.0
    %161 = vmatprep.subr.mxu0 0.0
    %162 = vmatpush1.xpose.msra.mxu0 0.0
    %163 = vmatprep.subr.mxu0 0.0
    %164 = vmatpush1.xpose.msra.mxu0 0.0
    %165 = vmatprep.subr.mxu0 0.0
    %166 = vmatpush1.xpose.msra.mxu0 0.0
    %167 = vmatprep.subr.mxu0 0.0
    %168 = vmatpush1.xpose.msra.mxu0 0.0
    %169 = vmatprep.subr.mxu0 0.0
    %170 = vmatpush1.xpose.msra.mxu0 0.0
    %171 = vmatprep.subr.mxu0 0.0
    %172 = vmatpush1.xpose.msra.mxu0 0.0
    %173 = vmatprep.subr.mxu0 0.0
    %174 = vmatpush1.xpose.msra.mxu0 0.0
    %175 = vmatprep.subr.mxu0 0.0
    %176 = vmatpush1.xpose.msra.mxu0 0.0
    %177 = vmatprep.subr.mxu0 0.0
    %178 = vmatpush1.xpose.msra.mxu0 0.0
    %179 = vmatprep.subr.mxu0 0.0
    %180 = vmatpush1.xpose.msra.mxu0 0.0
    %181 = vmatprep.subr.mxu0 0.0
    %182 = vmatpush1.xpose.msra.mxu0 0.0
    %183 = vmatprep.subr.mxu0 0.0
    %184 = vmatpush1.xpose.msra.mxu0 0.0
    %185 = vmatprep.subr.mxu0 0.0
    %186 = vmatpush1.xpose.msra.mxu0 0.0
    %187 = vmatprep.subr.mxu0 0.0
    %188 = vmatpush1.xpose.msra.mxu0 0.0
    %189 = vmatprep.subr.mxu0 0.0
    %190 = vmatpush1.xpose.msra.mxu0 0.0
    %191 = vmatprep.subr.mxu0 0.0
    %192 = vmatpush1.xpose.msra.mxu0 0.0
    %193 = vmatprep.subr.mxu0 0.0
    %194 = vmatpush1.xpose.msra.mxu0 0.0
    %195 = vmatprep.subr.mxu0 0.0
    %196 = vmatpush1.xpose.msra.mxu0 0.0
    %197 = vmatprep.subr.mxu0 0.0
    %198 = vmatpush1.xpose.msra.mxu0 0.0
    %199 = vmatprep.subr.mxu0 0.0
    %200 = vmatpush1.xpose.msra.mxu0 0.0
    %201 = vmatprep.subr.mxu0 0.0
    %202 = vmatpush1.xpose.msra.mxu0 0.0
    %203 = vmatprep.mubr.f32.mxu0 0.0
    %204 = vmatmul.mubr.f32.gmra.mrb[0].mxu0 %v54
    %v205 = vpop.f32.mrb[0].mxu0
    %v206 = vadd.f32 0.0, %v205
    %v207 = vpop.f32.mrb[0].mxu0
    %208 = vdwg.mxu0
    %v209 = vadd.f32 %v138, %v206
    %vm210 = vcmask 64512
    %211 = vst.msk [vmem:[#allocation2] sm:$0xff] %vm210, %v209
    // Predicated region
    $region26: #{tpu_custom_call.1} parent=1 // pred_check
      %p212 = pneg %p44
    $region27: #{tpu_custom_call.1} parent=1 // pred_check_branch
      %214 = sbr.rel (%p212) target = $region29
    $region28: #{tpu_custom_call.1} parent=1 // pred_region
      %v215 = vld [vmem:[#allocation5] sm:$0x1]
      %v216 = vmul.f32 %v215, 1.442695
      %v217 = vpow.pop %v216
      %v218 = vld [vmem:[#allocation3] sm:$0xff]
      %v219 = vrsqrt.pop %v218
      %v221 = vlaneseq
      %v222 = vshrl.u32 %v221, 7
      %v223 = vsub.s32 0, %v222
      %v224 = vrot.slane %v217, %v223
      %v226 = vmul.f32 %v219, %v224
      %v227 = vld [vmem:[#allocation4] sm:$0x1]
      %v228 = vrsqrt.pop %v227
      %v229 = vld [vmem:[#allocation2] sm:$0xff]
      %231 = vset.pattern.permute.xlu0 0
      %232 = vperm.xlu0 %231, %v226
      %v233 = vpop.permute.xlu0 %232
      %v235 = vmul.f32 %v229, %v233
      %v237 = vlaneseq
      %v238 = vshrl.u32 %v237, 7
      %v239 = vsub.s32 0, %v238
      %v240 = vrot.slane %v228, %v239
      %v242 = vmul.f32 %v235, %v240
      %243 = vst.msk [vmem:[#allocation11] sm:$0xff] %vm210, %v242
      %v244 = vlaneseq
      %v245 = vshrl.u32 %v244, 7
      %v246 = vlaneseq
      %v247 = vand.u32 %v246, 127
      %vm248 = vcmp.eq.s32.totalorder %v245, %v247
      %v249 = vsel %vm248, %v242, 0.0
      %v250 = vsel %vm210, %v249, 0.0
      %251 = vadd.xlane.f32.xlu0 %v250
      %v252 = vpop.xlane.xlu0 %251
      %v253 = vrot.slane %v252, 4
      %v254 = vadd.f32 %v252, %v253
      %v255 = vrot.slane %v254, 2
      %v256 = vadd.f32 %v254, %v255
      %v257 = vrot.slane %v256, 1
      %v258 = vadd.f32 %v256, %v257
      %s259 = vtos %v258
      %v260 = vsel %vm210, %v242, -inf
      %261 = vmax.xlane.f32.xlu0 %v260
      %v262 = vpop.xlane.xlu0 %261
      %v263 = vsub.f32 %v242, %v262
      %v264 = vmul.f32 %v263, 1.442695
      %v265 = vpow.pop %v264
      %v266 = vsel %vm210, %v265, 0.0
      %267 = vadd.xlane.f32.xlu0 %v266
      %v268 = vpop.xlane.xlu0 %267
      %v269 = vlog2.pop %v268
      %v270 = vmul.f32 %v269, 0.6931472
      %v271 = vadd.f32 %v270, %v262
      %v272 = vrot.slane %v260, 4
      %v273 = vmax.f32 %v260, %v272
      %v274 = vrot.slane %v273, 2
      %v275 = vmax.f32 %v273, %v274
      %v276 = vrot.slane %v275, 1
      %v277 = vmax.f32 %v275, %v276
      %v278 = vsub.f32 %v242, %v277
      %v279 = vmul.f32 %v278, 1.442695
      %v280 = vpow.pop %v279
      %v281 = vsel %vm210, %v280, 0.0
      %v282 = vrot.slane %v281, 4
      %v283 = vadd.f32 %v281, %v282
      %v284 = vrot.slane %v283, 2
      %v285 = vadd.f32 %v283, %v284
      %v286 = vrot.slane %v285, 1
      %v287 = vadd.f32 %v285, %v286
      %v288 = vlog2.pop %v287
      %v289 = vmul.f32 %v288, 0.6931472
      %v290 = vadd.f32 %v289, %v277
      %v291 = vsel %vm61, %v271, 0.0
      %292 = vadd.xlane.f32.xlu0 %v291
      %v293 = vpop.xlane.xlu0 %292
      %v294 = vrot.slane %v293, 4
      %v295 = vadd.f32 %v293, %v294
      %v296 = vrot.slane %v295, 2
      %v297 = vadd.f32 %v295, %v296
      %v298 = vrot.slane %v297, 1
      %v299 = vadd.f32 %v297, %v298
      %s300 = vtos %v299
      %v301 = vsel %vm136, %v290, 0.0
      %302 = vadd.xlane.f32.xlu0 %v301
      %v303 = vpop.xlane.xlu0 %302
      %v304 = vrot.slane %v303, 4
      %v305 = vadd.f32 %v303, %v304
      %v306 = vrot.slane %v305, 2
      %v307 = vadd.f32 %v305, %v306
      %v308 = vrot.slane %v307, 1
      %v309 = vadd.f32 %v307, %v308
      %s310 = vtos %v309
      %s311 = sadd.f32 %s300, %s310
      %s312 = smul.f32 %s259, 2.0
      %s313 = ssub.f32 %s311, %s312
      %s314 = smul.f32 %s313, 0.5
      %v315 = vrcp.pop 8.0
      %s316 = vtos %v315
      %s317 = smul.f32 %s314, %s316
      %v318 = vstv %s317
      %vm319 = vcmask 0
      %320 = vst.msk [vmem:[#allocation12] sm:$0x1] %vm319, %v318
    $region29: #{tpu_custom_call.1} parent=1 // pred_fallthru
      _
    // Predicated region
    $region30: #{tpu_custom_call.1} parent=1 // pred_check
      _
    $region31: #{tpu_custom_call.1} parent=1 // pred_check_branch
      %322 = sbr.rel (0) target = $region33
    $region32: #{tpu_custom_call.1} parent=1 // pred_region
      %s324 = ssub.s32 128, 128
      %325 = vsyncadd [#allocation8], %s324
      %s327 = sshll.u32 [#allocation11], 4
      %s328 = int_to_ptr.vmem [resolvable:$true] %s327
      %330 = dma.vmem_to_hbm [thread:$0]  %s328, 128, %s3, [#allocation8]
    $region33: #{tpu_custom_call.1} parent=1 // pred_fallthru
      _
    // Predicated region
    $region34: #{tpu_custom_call.1} parent=1 // pred_check
      _
    $region35: #{tpu_custom_call.1} parent=1 // pred_check_branch
      %332 = sbr.rel (0) target = $region37
    $region36: #{tpu_custom_call.1} parent=1 // pred_region
      %s334 = ssub.s32 16, 16
      %335 = vsyncadd [#allocation13], %s334
      %s337 = sshll.u32 [#allocation12], 4
      %s338 = int_to_ptr.vmem [resolvable:$true] %s337
      %340 = dma.vmem_to_hbm [thread:$0]  %s338, 16, %s4, [#allocation13]
    $region37: #{tpu_custom_call.1} parent=1 // pred_fallthru
      _
    // Predicated region
    $region38: #{tpu_custom_call.1} parent=1 // pred_check
      _
    $region39: #{tpu_custom_call.1} parent=1 // pred_check_branch
      %342 = sbr.rel (0) target = $region41
    $region40: #{tpu_custom_call.1} parent=1 // pred_region
      %343 = dma.done [#allocation8], 128
    $region41: #{tpu_custom_call.1} parent=1 // pred_fallthru
      _
    // Predicated region
    $region42: #{tpu_custom_call.1} parent=1 // pred_check
      _
    $region43: #{tpu_custom_call.1} parent=1 // pred_check_branch
      %345 = sbr.rel (0) target = $region45
    $region44: #{tpu_custom_call.1} parent=1 // pred_region
      %346 = dma.done [#allocation13], 16
    $region45: #{tpu_custom_call.1} parent=1 // pred_fallthru
      _
    %347 = vsyncpa [#allocation7], 1
    %348 = vsyncpa [#allocation10], 1
    %349 = vsyncpa [#allocation8], 1
    %350 = vsyncpa [#allocation13], 1

</llo_original>
